<compile_context>
chip_gen: v7x
topology: tpu7x:2x2x1
jax: 0.10.0
libtpu: 0.0.40
codegen_flags: <defaults>
</compile_context>

<pallas_src>
import math
from functools import partial

import jax
import jax.numpy as jnp
from jax import lax
from jax.experimental import pallas as pl
from jax.experimental.pallas import tpu as pltpu

# Module-level constants from the PyTorch spec.
d_embed = 64
context_length = 128


# -----------------------------------------------------------------------------
# Kernel: one batch element per grid step. Fused QKV projection + causal
# softmax attention, entirely in VMEM / on the MXU.
# -----------------------------------------------------------------------------
def head_attention_kernel(x_ref, wq_ref, wk_ref, wv_ref, o_ref, *, scale):
    x = x_ref[0]                                              # (T, D)

    # Projections (MXU, f32 accumulation). Fold the 1/sqrt(D) scale into Q
    # (cheaper than scaling the (T, T) score matrix).
    q = jnp.dot(x, wq_ref[...], preferred_element_type=jnp.float32) * scale
    k = jnp.dot(x, wk_ref[...], preferred_element_type=jnp.float32)
    v = jnp.dot(x, wv_ref[...], preferred_element_type=jnp.float32)

    # Scores (T, T).
    s = jnp.dot(q, k.T, preferred_element_type=jnp.float32)

    # Causal mask generated in-register (no HBM mask traffic). Equivalent to
    # masked_fill(tril(ones) == 0, -inf).
    T = s.shape[0]
    row = lax.broadcasted_iota(jnp.int32, (T, T), 0)
    col = lax.broadcasted_iota(jnp.int32, (T, T), 1)
    s = jnp.where(col <= row, s, -jnp.inf)

    # Numerically-stable softmax along the key axis.
    m = jnp.max(s, axis=-1, keepdims=True)
    p = jnp.exp(s - m)
    l = jnp.sum(p, axis=-1, keepdims=True)
    p = p / l

    # Attention output (T, H).
    out = jnp.dot(p, v, preferred_element_type=jnp.float32)
    o_ref[0] = out.astype(o_ref.dtype)


# -----------------------------------------------------------------------------
# Wrapper: grid over batch, weights block-invariant (no re-DMA per step).
# -----------------------------------------------------------------------------
def head_forward(x, wq, wk, wv):
    """x: (B, T, D); wq/wk/wv: (D, H)  ->  (B, T, H)."""
    B, T, D = x.shape
    H = wq.shape[1]
    scale = 1.0 / math.sqrt(D)  # matches PyTorch: / sqrt(feature_dimension)

    itemsize = jnp.dtype(x.dtype).itemsize
    flops = B * (3 * 2 * T * D * H + 2 * 2 * T * T * H)
    bytes_accessed = (B * T * D + 3 * D * H + B * T * H) * itemsize
    transcendentals = B * T * T  # exp in softmax

    kernel = partial(head_attention_kernel, scale=scale)

    return pl.pallas_call(
        kernel,
        out_shape=jax.ShapeDtypeStruct((B, T, H), x.dtype),
        grid_spec=pltpu.PrefetchScalarGridSpec(
            num_scalar_prefetch=0,
            grid=(B,),
            in_specs=[
                pl.BlockSpec((1, T, D), lambda b: (b, 0, 0)),  # x tile per batch
                pl.BlockSpec((D, H), lambda b: (0, 0)),        # Wq (block-invariant)
                pl.BlockSpec((D, H), lambda b: (0, 0)),        # Wk (block-invariant)
                pl.BlockSpec((D, H), lambda b: (0, 0)),        # Wv (block-invariant)
            ],
            out_specs=pl.BlockSpec((1, T, H), lambda b: (b, 0, 0)),
        ),
        compiler_params=pltpu.CompilerParams(
            dimension_semantics=("parallel",),  # megacore-shard the batch axis
        ),
        cost_estimate=pl.CostEstimate(
            flops=flops,
            transcendentals=transcendentals,
            bytes_accessed=bytes_accessed,
        ),
    )(x, wq, wk, wv)


if __name__ == "__main__":
    # Small deterministic demo consistent with the module: d_embed=64,
    # causal attention over a short sequence, head_size = d_embed // 4.
    head_size = 16
    B, T = 2, 8

    key = jax.random.PRNGKey(0)
    kx, kq, kk, kv = jax.random.split(key, 4)
    x = jax.random.normal(kx, (B, T, d_embed), dtype=jnp.float32)

    bound = 1.0 / math.sqrt(d_embed)  # nn.Linear default init range
    wq = jax.random.uniform(kq, (d_embed, head_size), jnp.float32, -bound, bound)
    wk = jax.random.uniform(kk, (d_embed, head_size), jnp.float32, -bound, bound)
    wv = jax.random.uniform(kv, (d_embed, head_size), jnp.float32, -bound, bound)

    out = head_forward(x, wq, wk, wv)
    out = jax.block_until_ready(out)

    # Pure-JAX reference mirroring the PyTorch forward (mask sliced to (T, T)).
    q = x @ wq
    k = x @ wk
    v = x @ wv
    s = (q @ jnp.swapaxes(k, -1, -2)) / math.sqrt(d_embed)
    mask = jnp.tril(jnp.ones((T, T), jnp.float32))
    s = jnp.where(mask == 0, -jnp.inf, s)
    p = jax.nn.softmax(s, axis=-1)
    ref = p @ v

    assert out.shape == (B, T, head_size)
    assert jnp.allclose(out, ref, atol=1e-5, rtol=1e-5)

    print("KERNEL_OK")
</pallas_src>

<mosaic_0001>
module attributes {stable_mosaic.version = 11 : i64} {
  func.func @head_attention_kernel(%arg0: i32, %arg1: memref<1x8x64xf32, #tpu.memory_space<vmem>>, %arg2: memref<64x16xf32, #tpu.memory_space<vmem>>, %arg3: memref<64x16xf32, #tpu.memory_space<vmem>>, %arg4: memref<64x16xf32, #tpu.memory_space<vmem>>, %arg5: memref<1x8x16xf32, #tpu.memory_space<vmem>>) attributes {dimension_semantics = [#tpu.dimension_semantics<parallel>], iteration_bounds = array<i64: 2>, scalar_prefetch = 0 : i64, scratch_operands = 0 : i64, tpu.core_type = #tpu.core_type<tc>, window_params = [{transform_indices = @transform_0, window_bounds = array<i64: 1, 8, 64>}, {pipeline_mode = #tpu.pipeline_mode<synchronous>, transform_indices = @transform_1, window_bounds = array<i64: 64, 16>}, {pipeline_mode = #tpu.pipeline_mode<synchronous>, transform_indices = @transform_2, window_bounds = array<i64: 64, 16>}, {pipeline_mode = #tpu.pipeline_mode<synchronous>, transform_indices = @transform_3, window_bounds = array<i64: 64, 16>}, {transform_indices = @transform_4, window_bounds = array<i64: 1, 8, 16>}]} {
    %c0 = arith.constant 0 : index
    %c0_0 = arith.constant 0 : index
    %c0_1 = arith.constant 0 : index
    %0 = vector.load %arg1[%c0, %c0_0, %c0_1] : memref<1x8x64xf32, #tpu.memory_space<vmem>>, vector<1x8x64xf32>
    %1 = vector.shape_cast %0 : vector<1x8x64xf32> to vector<8x64xf32>
    %c0_2 = arith.constant 0 : index
    %c0_3 = arith.constant 0 : index
    %2 = vector.load %arg2[%c0_2, %c0_3] : memref<64x16xf32, #tpu.memory_space<vmem>>, vector<64x16xf32>
    %cst = arith.constant dense<0.000000e+00> : vector<8x16xf32>
    %3 = tpu.matmul %1, %2, %cst {dimension_numbers = #tpu.dot_dimension_numbers<[1], [0], [0], [1], [0, 0, 1, 1], [], []>} : vector<8x64xf32>, vector<64x16xf32>, vector<8x16xf32> -> vector<8x16xf32>
    %cst_4 = arith.constant 1.250000e-01 : f32
    %4 = vector.broadcast %cst_4 : f32 to vector<8x16xf32>
    %5 = arith.mulf %3, %4 : vector<8x16xf32>
    %c0_5 = arith.constant 0 : index
    %c0_6 = arith.constant 0 : index
    %6 = vector.load %arg3[%c0_5, %c0_6] : memref<64x16xf32, #tpu.memory_space<vmem>>, vector<64x16xf32>
    %cst_7 = arith.constant dense<0.000000e+00> : vector<8x16xf32>
    %7 = tpu.matmul %1, %6, %cst_7 {dimension_numbers = #tpu.dot_dimension_numbers<[1], [0], [0], [1], [0, 0, 1, 1], [], []>} : vector<8x64xf32>, vector<64x16xf32>, vector<8x16xf32> -> vector<8x16xf32>
    %c0_8 = arith.constant 0 : index
    %c0_9 = arith.constant 0 : index
    %8 = vector.load %arg4[%c0_8, %c0_9] : memref<64x16xf32, #tpu.memory_space<vmem>>, vector<64x16xf32>
    %cst_10 = arith.constant dense<0.000000e+00> : vector<8x16xf32>
    %9 = tpu.matmul %1, %8, %cst_10 {dimension_numbers = #tpu.dot_dimension_numbers<[1], [0], [0], [1], [0, 0, 1, 1], [], []>} : vector<8x64xf32>, vector<64x16xf32>, vector<8x16xf32> -> vector<8x16xf32>
    %10 = tpu.transpose %7, [1, 0] : vector<8x16xf32> -> vector<16x8xf32>
    %cst_11 = arith.constant dense<0.000000e+00> : vector<8x8xf32>
    %11 = tpu.matmul %5, %10, %cst_11 {dimension_numbers = #tpu.dot_dimension_numbers<[1], [0], [0], [1], [0, 0, 1, 1], [], []>} : vector<8x16xf32>, vector<16x8xf32>, vector<8x8xf32> -> vector<8x8xf32>
    %12 = tpu.iota {dimensions = array<i32: 0>} : vector<8x8xi32>
    %13 = tpu.iota {dimensions = array<i32: 1>} : vector<8x8xi32>
    %14 = arith.cmpi sle, %13, %12 : vector<8x8xi32>
    %cst_12 = arith.constant 0xFF800000 : f32
    %15 = vector.broadcast %cst_12 : f32 to vector<8x8xf32>
    %16 = arith.select %14, %11, %15 : vector<8x8xi1>, vector<8x8xf32>
    %cst_13 = arith.constant dense<0xFF800000> : vector<8xf32>
    %17 = vector.multi_reduction <maximumf>, %16, %cst_13 [1] : vector<8x8xf32> to vector<8xf32>
    %18 = vector.shape_cast %17 : vector<8xf32> to vector<8x1xf32>
    %19 = vector.broadcast %18 : vector<8x1xf32> to vector<8x8xf32>
    %20 = arith.subf %16, %19 : vector<8x8xf32>
    %21 = math.exp %20 : vector<8x8xf32>
    %cst_14 = arith.constant dense<0.000000e+00> : vector<8xf32>
    %22 = vector.multi_reduction <add>, %21, %cst_14 [1] : vector<8x8xf32> to vector<8xf32>
    %23 = vector.shape_cast %22 : vector<8xf32> to vector<8x1xf32>
    %24 = vector.broadcast %23 : vector<8x1xf32> to vector<8x8xf32>
    %25 = arith.divf %21, %24 : vector<8x8xf32>
    %cst_15 = arith.constant dense<0.000000e+00> : vector<8x16xf32>
    %26 = tpu.matmul %25, %9, %cst_15 {dimension_numbers = #tpu.dot_dimension_numbers<[1], [0], [0], [1], [0, 0, 1, 1], [], []>} : vector<8x8xf32>, vector<8x16xf32>, vector<8x16xf32> -> vector<8x16xf32>
    %c0_16 = arith.constant 0 : index
    %c0_17 = arith.constant 0 : index
    %c0_18 = arith.constant 0 : index
    %27 = vector.load %arg5[%c0_16, %c0_17, %c0_18] : memref<1x8x16xf32, #tpu.memory_space<vmem>>, vector<1x8x16xf32>
    %28 = vector.shape_cast %27 : vector<1x8x16xf32> to vector<8x16xf32>
    %29 = vector.shape_cast %26 : vector<8x16xf32> to vector<1x8x16xf32>
    tpu.vector_store %arg5[%c0_16, %c0_17, %c0_18], %29 {strides = array<i32>} : memref<1x8x16xf32, #tpu.memory_space<vmem>>, vector<1x8x16xf32>,
    return
  }
  func.func @transform_0(%arg0: i32) -> (i32, i32, i32) {
    %c0_i32 = arith.constant 0 : i32
    %c0_i32_0 = arith.constant 0 : i32
    %c0_i32_1 = arith.constant 0 : i32
    return %arg0, %c0_i32, %c0_i32_0 : i32, i32, i32
  }
  func.func @transform_1(%arg0: i32) -> (i32, i32) {
    %c0_i32 = arith.constant 0 : i32
    %c0_i32_0 = arith.constant 0 : i32
    %c0_i32_1 = arith.constant 0 : i32
    return %c0_i32, %c0_i32_0 : i32, i32
  }
  func.func @transform_2(%arg0: i32) -> (i32, i32) {
    %c0_i32 = arith.constant 0 : i32
    %c0_i32_0 = arith.constant 0 : i32
    %c0_i32_1 = arith.constant 0 : i32
    return %c0_i32, %c0_i32_0 : i32, i32
  }
  func.func @transform_3(%arg0: i32) -> (i32, i32) {
    %c0_i32 = arith.constant 0 : i32
    %c0_i32_0 = arith.constant 0 : i32
    %c0_i32_1 = arith.constant 0 : i32
    return %c0_i32, %c0_i32_0 : i32, i32
  }
  func.func @transform_4(%arg0: i32) -> (i32, i32, i32) {
    %c0_i32 = arith.constant 0 : i32
    %c0_i32_0 = arith.constant 0 : i32
    %c0_i32_1 = arith.constant 0 : i32
    return %arg0, %c0_i32, %c0_i32_0 : i32, i32, i32
  }
}

</mosaic_0001>

<llo_original>
// kernel: tpu_custom_call.1
$region0: #{tpu_custom_call.1}
  #allocation0 [shape = 'u32[]', space=smem, size = 0x4, offset = 0x4, fixed_abs, tag = 'smem constant byte address 0x4 - core index']
  #allocation1 [shape = 'u32[144,128]{1,0:T(1,128)}', space=vmem, size = 0x12000, scoped, tag = 'internal scratch']
  %s0 = inlined_call_operand.vmem [shape: f32[2,8,64], index: 0, kind: input, shape index: {}]
  %s1 = inlined_call_operand.vmem [shape: f32[64,16], index: 1, kind: input, shape index: {}]
  %s2 = inlined_call_operand.vmem [shape: f32[64,16], index: 2, kind: input, shape index: {}]
  %s3 = inlined_call_operand.vmem [shape: f32[64,16], index: 3, kind: input, shape index: {}]
  %s4 = inlined_call_operand.hbm [shape: f32[2,8,16], index: 4, kind: output, shape index: {}]
  %s5 = sld [smem:[#allocation0]]
  $region49: #{tpu_custom_call.1} parent=0
    _
  %s7 = ssub.s32 1, %s5
  %s8 = scalar_select 0, %s7, %s5
  $region1: #{tpu_custom_call.1} parent=0
    #allocation2 [shape = 'u8[8192]{0}', space=vmem, size = 0x2000, scoped, tag = 'output window, operand 0']
    #allocation3 [shape = 's32[2]{0}', space=sflag, size = 0x8, scoped, tag = 'scoped memory for tpu_custom_call.1']
    %9 = vsyncpa [#allocation3], 0
    %s10 = scalar_lea.sflag [#allocation3], 1
    %11 = vsyncpa %s10, 0
    loop: start=0, step=1, limit=4
    $region2: #{tpu_custom_call.1} parent=1 // loop_pre_header
      _
    $region3: #{tpu_custom_call.1} parent=1 // loop_header
      %s13 = sphi 0, %s17
      %p14 = scmp.ge.s32.totalorder %s13, 4
      %s23 = sphi 0, %s25
      %s26 = sphi 0, %s23
      %s27 = sphi 0, %s26
      %s43 = sphi 0, %s27
      %s47 = sphi 0, %s47
      %s49 = sphi 0, %s47
      %s50 = sphi 0, %s49
      %s64 = sphi 0, %s50
      %s68 = sphi 0, %s68
      %s70 = sphi 0, %s68
      %s71 = sphi 0, %s70
      %s85 = sphi 0, %s71
      %s89 = sphi 0, %s89
      %s91 = sphi 0, %s89
      %s92 = sphi 0, %s91
      %s106 = sphi 0, %s92
      %s112 = sphi 0, %s114
      %s115 = sphi 0, %s112
      %s116 = sphi 0, %s115
      %s132 = sphi 0, %s116
    $region4: #{tpu_custom_call.1} parent=1 // loop_header_branch
      %16 = sbr.rel (%p14) target = $region8
    $region5: #{tpu_custom_call.1} parent=1 // loop_body
      %s18 = ssub.s32 %s13, 1
      %s19 = ssub.s32 %s13, 2
      %s20 = sadd.s32 %s13, 1
      %s21 = ssub.s32 %s13, %s20
      %p22 = scmp.eq.s32.totalorder %s21, 0
      %s24 = sadd.s32 %s23, 1
      %s25 = scalar_select %p22, %s23, %s24
      %p28 = pneg %p22
      %p29 = scmp.eq.s32.totalorder %s13, 1
      %p30 = por %p28, %p29
      %p31 = scmp.ne.s32.totalorder %s23, %s26
      %p32 = scmp.eq.s32.totalorder %s13, 0
      %p33 = por %p31, %p32
      %p34 = scmp.ne.s32.totalorder %s23, %s26
      %p35 = scmp.eq.s32.totalorder %s18, 1
      %p36 = por %p34, %p35
      %p37 = scmp.ne.s32.totalorder %s26, %s27
      %p38 = scmp.eq.s32.totalorder %s18, 0
      %p39 = por %p37, %p38
      %p40 = scmp.ne.s32.totalorder %s26, %s27
      %p41 = scmp.eq.s32.totalorder %s19, 1
      %p42 = por %p40, %p41
      %p44 = scmp.ne.s32.totalorder %s27, %s43
      %p45 = scmp.eq.s32.totalorder %s19, 0
      %p46 = por %p44, %p45
      %s48 = sadd.s32 %s47, 1
      %p51 = scmp.eq.s32.totalorder %s13, 1
      %p52 = scmp.ne.s32.totalorder %s47, %s49
      %p53 = scmp.eq.s32.totalorder %s13, 0
      %p54 = por %p52, %p53
      %p55 = scmp.ne.s32.totalorder %s47, %s49
      %p56 = scmp.eq.s32.totalorder %s18, 1
      %p57 = por %p55, %p56
      %p58 = scmp.ne.s32.totalorder %s49, %s50
      %p59 = scmp.eq.s32.totalorder %s18, 0
      %p60 = por %p58, %p59
      %p61 = scmp.ne.s32.totalorder %s49, %s50
      %p62 = scmp.eq.s32.totalorder %s19, 1
      %p63 = por %p61, %p62
      %p65 = scmp.ne.s32.totalorder %s50, %s64
      %p66 = scmp.eq.s32.totalorder %s19, 0
      %p67 = por %p65, %p66
      %s69 = sadd.s32 %s68, 1
      %p72 = scmp.eq.s32.totalorder %s13, 1
      %p73 = scmp.ne.s32.totalorder %s68, %s70
      %p74 = scmp.eq.s32.totalorder %s13, 0
      %p75 = por %p73, %p74
      %p76 = scmp.ne.s32.totalorder %s68, %s70
      %p77 = scmp.eq.s32.totalorder %s18, 1
      %p78 = por %p76, %p77
      %p79 = scmp.ne.s32.totalorder %s70, %s71
      %p80 = scmp.eq.s32.totalorder %s18, 0
      %p81 = por %p79, %p80
      %p82 = scmp.ne.s32.totalorder %s70, %s71
      %p83 = scmp.eq.s32.totalorder %s19, 1
      %p84 = por %p82, %p83
      %p86 = scmp.ne.s32.totalorder %s71, %s85
      %p87 = scmp.eq.s32.totalorder %s19, 0
      %p88 = por %p86, %p87
      %s90 = sadd.s32 %s89, 1
      %p93 = scmp.eq.s32.totalorder %s13, 1
      %p94 = scmp.ne.s32.totalorder %s89, %s91
      %p95 = scmp.eq.s32.totalorder %s13, 0
      %p96 = por %p94, %p95
      %p97 = scmp.ne.s32.totalorder %s89, %s91
      %p98 = scmp.eq.s32.totalorder %s18, 1
      %p99 = por %p97, %p98
      %p100 = scmp.ne.s32.totalorder %s91, %s92
      %p101 = scmp.eq.s32.totalorder %s18, 0
      %p102 = por %p100, %p101
      %p103 = scmp.ne.s32.totalorder %s91, %s92
      %p104 = scmp.eq.s32.totalorder %s19, 1
      %p105 = por %p103, %p104
      %p107 = scmp.ne.s32.totalorder %s92, %s106
      %p108 = scmp.eq.s32.totalorder %s19, 0
      %p109 = por %p107, %p108
      %s110 = ssub.s32 %s13, %s20
      %p111 = scmp.eq.s32.totalorder %s110, 0
      %s113 = sadd.s32 %s112, 1
      %s114 = scalar_select %p111, %s112, %s113
      %p117 = pneg %p111
      %p118 = scmp.eq.s32.totalorder %s13, 1
      %p119 = por %p117, %p118
      %p120 = scmp.ne.s32.totalorder %s112, %s115
      %p121 = scmp.eq.s32.totalorder %s13, 0
      %p122 = por %p120, %p121
      %p123 = scmp.ne.s32.totalorder %s112, %s115
      %p124 = scmp.eq.s32.totalorder %s18, 1
      %p125 = por %p123, %p124
      %p126 = scmp.ne.s32.totalorder %s115, %s116
      %p127 = scmp.eq.s32.totalorder %s18, 0
      %p128 = por %p126, %p127
      %p129 = scmp.ne.s32.totalorder %s115, %s116
      %p130 = scmp.eq.s32.totalorder %s19, 1
      %p131 = por %p129, %p130
      %p133 = scmp.ne.s32.totalorder %s116, %s132
      %p134 = scmp.eq.s32.totalorder %s19, 0
      %p135 = por %p133, %p134
      %p136 = scmp.le.s32.totalorder 1, %s13
      %p137 = scmp.lt.s32.totalorder %s13, 3
      %p138 = pnand %p136, %p137
      %p139 = pneg %p138
      // Predicated region
      $region9: #{tpu_custom_call.1} parent=5 // pred_check
        _
      $region10: #{tpu_custom_call.1} parent=5 // pred_check_branch
        %141 = sbr.rel (%p138) target = $region12
      $region11: #{tpu_custom_call.1} parent=5 // pred_region
        %s142 = ssub.s32 %s13, 1
        // Predicated region
        $region13: #{tpu_custom_call.1} parent=11 // pred_check
          %p143 = pneg %p60
        $region14: #{tpu_custom_call.1} parent=11 // pred_check_branch
          %145 = sbr.rel (%p143) target = $region16
        $region15: #{tpu_custom_call.1} parent=11 // pred_region
          _
        $region16: #{tpu_custom_call.1} parent=11 // pred_fallthru
          _
        // Predicated region
        $region17: #{tpu_custom_call.1} parent=11 // pred_check
          %p146 = pneg %p81
        $region18: #{tpu_custom_call.1} parent=11 // pred_check_branch
          %148 = sbr.rel (%p146) target = $region20
        $region19: #{tpu_custom_call.1} parent=11 // pred_region
          _
        $region20: #{tpu_custom_call.1} parent=11 // pred_fallthru
          _
        // Predicated region
        $region21: #{tpu_custom_call.1} parent=11 // pred_check
          %p149 = pneg %p102
        $region22: #{tpu_custom_call.1} parent=11 // pred_check_branch
          %151 = sbr.rel (%p149) target = $region24
        $region23: #{tpu_custom_call.1} parent=11 // pred_region
          _
        $region24: #{tpu_custom_call.1} parent=11 // pred_fallthru
          _
      $region12: #{tpu_custom_call.1} parent=5 // pred_fallthru
        _
      %p152 = scmp.lt.s32.totalorder %s13, 2
      // Predicated region
      $region25: #{tpu_custom_call.1} parent=5 // pred_check
        %p153 = pneg %p152
      $region26: #{tpu_custom_call.1} parent=5 // pred_check_branch
        %155 = sbr.rel (%p153) target = $region28
      $region27: #{tpu_custom_call.1} parent=5 // pred_region
        // Predicated region
        $region29: #{tpu_custom_call.1} parent=27 // pred_check
          %p156 = pneg %p33
        $region30: #{tpu_custom_call.1} parent=27 // pred_check_branch
          %158 = sbr.rel (%p156) target = $region32
        $region31: #{tpu_custom_call.1} parent=27 // pred_region
          %p159 = scmp.lt.s32.totalorder %s13, 1
          %s160 = scalar_select %p159, %s13, 1
          %s161 = smul.addr %s160, 8
          %s162 = scalar_lea.vmem %s0, %s161
        $region32: #{tpu_custom_call.1} parent=27 // pred_fallthru
          _
      $region28: #{tpu_custom_call.1} parent=5 // pred_fallthru
        _
      %p163 = scmp.le.s32.totalorder 1, %s13
      %p164 = scmp.lt.s32.totalorder %s13, 3
      %p165 = pnand %p163, %p164
      %p166 = pneg %p165
      // Predicated region
      $region33: #{tpu_custom_call.1} parent=5 // pred_check
        _
      $region34: #{tpu_custom_call.1} parent=5 // pred_check_branch
        %168 = sbr.rel (%p165) target = $region36
      $region35: #{tpu_custom_call.1} parent=5 // pred_region
        %s169 = ssub.s32 %s13, 1
        %p170 = scmp.lt.s32.totalorder %s18, 1
        %s171 = scalar_select %p170, %s18, 1
        %s172 = smul.addr %s171, 8
        %s173 = scalar_lea.vmem %s0, %s172
        %p174 = pneg %p39
        %p175 = pneg %p36
        %p176 = pneg %p60
        %p177 = pneg %p57
        %p178 = pneg %p81
        %p179 = pneg %p78
        %p180 = pneg %p102
        %p181 = pneg %p99
        %p182 = pneg %p128
        %p183 = pneg %p125
        %s184 = sand.u32 %s115, 1
        %s185 = scalar_lea.sflag [#allocation3], %s184
        %s186 = sand.u32 %s115, 1
        %s187 = smul.addr %s186, 8
        %s188 = scalar_lea.vmem [#allocation2], %s187
        %p189 = scmp.lt.s32.totalorder %s18, 1
        %s190 = scalar_select %p189, %s18, 1
        %s191 = smul.addr %s190, 8
        %s192 = scalar_lea.vmem %s0, %s191
        %v193 = vld [vmem:[%s192] sm:$0xff]
        %v194 = vld [vmem:[%s1] sm:$0xff]
        %v195 = vld [vmem:[%s1 + $0x8] sm:$0xff]
        %v196 = vld [vmem:[%s1 + $0x10] sm:$0xff]
        %v197 = vld [vmem:[%s1 + $0x18] sm:$0xff]
        %v198 = vld [vmem:[%s1 + $0x20] sm:$0xff]
        %v199 = vld [vmem:[%s1 + $0x28] sm:$0xff]
        %v200 = vld [vmem:[%s1 + $0x30] sm:$0xff]
        %v201 = vld [vmem:[%s1 + $0x38] sm:$0xff]
        %vm202 = vcmask 523264
        %v204 = vsel %vm202, %v193, 0
        %206 = vmatprep.subr.mxu0 0.0
        %207 = vmatpush1.msra.mxu0 %v194
        %208 = vmatprep.subr.mxu0 0.0
        %209 = vmatpush1.msra.mxu0 %v195
        %210 = vmatprep.subr.mxu0 0.0
        %211 = vmatpush1.msra.mxu0 %v196
        %212 = vmatprep.subr.mxu0 0.0
        %213 = vmatpush1.msra.mxu0 %v197
        %214 = vmatprep.subr.mxu0 0.0
        %215 = vmatpush1.msra.mxu0 %v198
        %216 = vmatprep.subr.mxu0 0.0
        %217 = vmatpush1.msra.mxu0 %v199
        %218 = vmatprep.subr.mxu0 0.0
        %219 = vmatpush1.msra.mxu0 %v200
        %220 = vmatprep.subr.mxu0 0.0
        %221 = vmatpush1.msra.mxu0 %v201
        %222 = vmatprep.subr.mxu0 0.0
        %223 = vmatpush1.msra.mxu0 0.0
        %224 = vmatprep.subr.mxu0 0.0
        %225 = vmatpush1.msra.mxu0 0.0
        %226 = vmatprep.subr.mxu0 0.0
        %227 = vmatpush1.msra.mxu0 0.0
        %228 = vmatprep.subr.mxu0 0.0
        %229 = vmatpush1.msra.mxu0 0.0
        %230 = vmatprep.subr.mxu0 0.0
        %231 = vmatpush1.msra.mxu0 0.0
        %232 = vmatprep.subr.mxu0 0.0
        %233 = vmatpush1.msra.mxu0 0.0
        %234 = vmatprep.subr.mxu0 0.0
        %235 = vmatpush1.msra.mxu0 0.0
        %236 = vmatprep.subr.mxu0 0.0
        %237 = vmatpush1.msra.mxu0 0.0
        %238 = vmatprep.subr.mxu0 0.0
        %239 = vmatpush1.msra.mxu0 0.0
        %240 = vmatprep.subr.mxu0 0.0
        %241 = vmatpush1.msra.mxu0 0.0
        %242 = vmatprep.subr.mxu0 0.0
        %243 = vmatpush1.msra.mxu0 0.0
        %244 = vmatprep.subr.mxu0 0.0
        %245 = vmatpush1.msra.mxu0 0.0
        %246 = vmatprep.subr.mxu0 0.0
        %247 = vmatpush1.msra.mxu0 0.0
        %248 = vmatprep.subr.mxu0 0.0
        %249 = vmatpush1.msra.mxu0 0.0
        %250 = vmatprep.subr.mxu0 0.0
        %251 = vmatpush1.msra.mxu0 0.0
        %252 = vmatprep.subr.mxu0 0.0
        %253 = vmatpush1.msra.mxu0 0.0
        %254 = vmatprep.subr.mxu0 0.0
        %255 = vmatpush1.msra.mxu0 0.0
        %256 = vmatprep.subr.mxu0 0.0
        %257 = vmatpush1.msra.mxu0 0.0
        %258 = vmatprep.subr.mxu0 0.0
        %259 = vmatpush1.msra.mxu0 0.0
        %260 = vmatprep.subr.mxu0 0.0
        %261 = vmatpush1.msra.mxu0 0.0
        %262 = vmatprep.subr.mxu0 0.0
        %263 = vmatpush1.msra.mxu0 0.0
        %264 = vmatprep.subr.mxu0 0.0
        %265 = vmatpush1.msra.mxu0 0.0
        %266 = vmatprep.subr.mxu0 0.0
        %267 = vmatpush1.msra.mxu0 0.0
        %268 = vmatprep.subr.mxu0 0.0
        %269 = vmatpush1.msra.mxu0 0.0
        %270 = vmatprep.mubr.f32.mxu0 0.0
        %271 = vmatmul.mubr.f32.gmra.mrb[0].mxu0 %v204
        %v272 = vpop.f32.mrb[0].mxu0
        %v273 = vadd.f32 0.0, %v272
        %v274 = vpop.f32.mrb[0].mxu0
        %275 = vdwg.mxu0
        %v276 = vmul.f32 %v273, 0.125
        %v277 = vld [vmem:[%s2] sm:$0xff]
        %v278 = vld [vmem:[%s2 + $0x8] sm:$0xff]
        %v279 = vld [vmem:[%s2 + $0x10] sm:$0xff]
        %v280 = vld [vmem:[%s2 + $0x18] sm:$0xff]
        %v281 = vld [vmem:[%s2 + $0x20] sm:$0xff]
        %v282 = vld [vmem:[%s2 + $0x28] sm:$0xff]
        %v283 = vld [vmem:[%s2 + $0x30] sm:$0xff]
        %v284 = vld [vmem:[%s2 + $0x38] sm:$0xff]
        %285 = vmatprep.subr.mxu0 0.0
        %286 = vmatpush1.msra.mxu0 %v277
        %287 = vmatprep.subr.mxu0 0.0
        %288 = vmatpush1.msra.mxu0 %v278
        %289 = vmatprep.subr.mxu0 0.0
        %290 = vmatpush1.msra.mxu0 %v279
        %291 = vmatprep.subr.mxu0 0.0
        %292 = vmatpush1.msra.mxu0 %v280
        %293 = vmatprep.subr.mxu0 0.0
        %294 = vmatpush1.msra.mxu0 %v281
        %295 = vmatprep.subr.mxu0 0.0
        %296 = vmatpush1.msra.mxu0 %v282
        %297 = vmatprep.subr.mxu0 0.0
        %298 = vmatpush1.msra.mxu0 %v283
        %299 = vmatprep.subr.mxu0 0.0
        %300 = vmatpush1.msra.mxu0 %v284
        %301 = vmatprep.subr.mxu0 0.0
        %302 = vmatpush1.msra.mxu0 0.0
        %303 = vmatprep.subr.mxu0 0.0
        %304 = vmatpush1.msra.mxu0 0.0
        %305 = vmatprep.subr.mxu0 0.0
        %306 = vmatpush1.msra.mxu0 0.0
        %307 = vmatprep.subr.mxu0 0.0
        %308 = vmatpush1.msra.mxu0 0.0
        %309 = vmatprep.subr.mxu0 0.0
        %310 = vmatpush1.msra.mxu0 0.0
        %311 = vmatprep.subr.mxu0 0.0
        %312 = vmatpush1.msra.mxu0 0.0
        %313 = vmatprep.subr.mxu0 0.0
        %314 = vmatpush1.msra.mxu0 0.0
        %315 = vmatprep.subr.mxu0 0.0
        %316 = vmatpush1.msra.mxu0 0.0
        %317 = vmatprep.subr.mxu0 0.0
        %318 = vmatpush1.msra.mxu0 0.0
        %319 = vmatprep.subr.mxu0 0.0
        %320 = vmatpush1.msra.mxu0 0.0
        %321 = vmatprep.subr.mxu0 0.0
        %322 = vmatpush1.msra.mxu0 0.0
        %323 = vmatprep.subr.mxu0 0.0
        %324 = vmatpush1.msra.mxu0 0.0
        %325 = vmatprep.subr.mxu0 0.0
        %326 = vmatpush1.msra.mxu0 0.0
        %327 = vmatprep.subr.mxu0 0.0
        %328 = vmatpush1.msra.mxu0 0.0
        %329 = vmatprep.subr.mxu0 0.0
        %330 = vmatpush1.msra.mxu0 0.0
        %331 = vmatprep.subr.mxu0 0.0
        %332 = vmatpush1.msra.mxu0 0.0
        %333 = vmatprep.subr.mxu0 0.0
        %334 = vmatpush1.msra.mxu0 0.0
        %335 = vmatprep.subr.mxu0 0.0
        %336 = vmatpush1.msra.mxu0 0.0
        %337 = vmatprep.subr.mxu0 0.0
        %338 = vmatpush1.msra.mxu0 0.0
        %339 = vmatprep.subr.mxu0 0.0
        %340 = vmatpush1.msra.mxu0 0.0
        %341 = vmatprep.subr.mxu0 0.0
        %342 = vmatpush1.msra.mxu0 0.0
        %343 = vmatprep.subr.mxu0 0.0
        %344 = vmatpush1.msra.mxu0 0.0
        %345 = vmatprep.subr.mxu0 0.0
        %346 = vmatpush1.msra.mxu0 0.0
        %347 = vmatprep.subr.mxu0 0.0
        %348 = vmatpush1.msra.mxu0 0.0
        %349 = vmatprep.mubr.f32.mxu0 0.0
        %350 = vmatmul.mubr.f32.gmra.mrb[0].mxu0 %v204
        %v351 = vpop.f32.mrb[0].mxu0
        %v352 = vadd.f32 0.0, %v351
        %v353 = vpop.f32.mrb[0].mxu0
        %354 = vdwg.mxu0
        %v355 = vld [vmem:[%s3] sm:$0xff]
        %v356 = vld [vmem:[%s3 + $0x8] sm:$0xff]
        %v357 = vld [vmem:[%s3 + $0x10] sm:$0xff]
        %v358 = vld [vmem:[%s3 + $0x18] sm:$0xff]
        %v359 = vld [vmem:[%s3 + $0x20] sm:$0xff]
        %v360 = vld [vmem:[%s3 + $0x28] sm:$0xff]
        %v361 = vld [vmem:[%s3 + $0x30] sm:$0xff]
        %v362 = vld [vmem:[%s3 + $0x38] sm:$0xff]
        %363 = vmatprep.subr.mxu0 0.0
        %364 = vmatpush1.msra.mxu0 %v355
        %365 = vmatprep.subr.mxu0 0.0
        %366 = vmatpush1.msra.mxu0 %v356
        %367 = vmatprep.subr.mxu0 0.0
        %368 = vmatpush1.msra.mxu0 %v357
        %369 = vmatprep.subr.mxu0 0.0
        %370 = vmatpush1.msra.mxu0 %v358
        %371 = vmatprep.subr.mxu0 0.0
        %372 = vmatpush1.msra.mxu0 %v359
        %373 = vmatprep.subr.mxu0 0.0
        %374 = vmatpush1.msra.mxu0 %v360
        %375 = vmatprep.subr.mxu0 0.0
        %376 = vmatpush1.msra.mxu0 %v361
        %377 = vmatprep.subr.mxu0 0.0
        %378 = vmatpush1.msra.mxu0 %v362
        %379 = vmatprep.subr.mxu0 0.0
        %380 = vmatpush1.msra.mxu0 0.0
        %381 = vmatprep.subr.mxu0 0.0
        %382 = vmatpush1.msra.mxu0 0.0
        %383 = vmatprep.subr.mxu0 0.0
        %384 = vmatpush1.msra.mxu0 0.0
        %385 = vmatprep.subr.mxu0 0.0
        %386 = vmatpush1.msra.mxu0 0.0
        %387 = vmatprep.subr.mxu0 0.0
        %388 = vmatpush1.msra.mxu0 0.0
        %389 = vmatprep.subr.mxu0 0.0
        %390 = vmatpush1.msra.mxu0 0.0
        %391 = vmatprep.subr.mxu0 0.0
        %392 = vmatpush1.msra.mxu0 0.0
        %393 = vmatprep.subr.mxu0 0.0
        %394 = vmatpush1.msra.mxu0 0.0
        %395 = vmatprep.subr.mxu0 0.0
        %396 = vmatpush1.msra.mxu0 0.0
        %397 = vmatprep.subr.mxu0 0.0
        %398 = vmatpush1.msra.mxu0 0.0
        %399 = vmatprep.subr.mxu0 0.0
        %400 = vmatpush1.msra.mxu0 0.0
        %401 = vmatprep.subr.mxu0 0.0
        %402 = vmatpush1.msra.mxu0 0.0
        %403 = vmatprep.subr.mxu0 0.0
        %404 = vmatpush1.msra.mxu0 0.0
        %405 = vmatprep.subr.mxu0 0.0
        %406 = vmatpush1.msra.mxu0 0.0
        %407 = vmatprep.subr.mxu0 0.0
        %408 = vmatpush1.msra.mxu0 0.0
        %409 = vmatprep.subr.mxu0 0.0
        %410 = vmatpush1.msra.mxu0 0.0
        %411 = vmatprep.subr.mxu0 0.0
        %412 = vmatpush1.msra.mxu0 0.0
        %413 = vmatprep.subr.mxu0 0.0
        %414 = vmatpush1.msra.mxu0 0.0
        %415 = vmatprep.subr.mxu0 0.0
        %416 = vmatpush1.msra.mxu0 0.0
        %417 = vmatprep.subr.mxu0 0.0
        %418 = vmatpush1.msra.mxu0 0.0
        %419 = vmatprep.subr.mxu0 0.0
        %420 = vmatpush1.msra.mxu0 0.0
        %421 = vmatprep.subr.mxu0 0.0
        %422 = vmatpush1.msra.mxu0 0.0
        %423 = vmatprep.subr.mxu0 0.0
        %424 = vmatpush1.msra.mxu0 0.0
        %425 = vmatprep.subr.mxu0 0.0
        %426 = vmatpush1.msra.mxu0 0.0
        %427 = vmatprep.mubr.f32.mxu0 0.0
        %428 = vmatmul.mubr.f32.gmra.mrb[0].mxu0 %v204
        %v429 = vpop.f32.mrb[0].mxu0
        %v430 = vadd.f32 0.0, %v429
        %v431 = vpop.f32.mrb[0].mxu0
        %432 = vdwg.mxu0
        %vm433 = vcmask 130048
        %v435 = vsel %vm433, %v276, 0
        %v438 = vsel %vm433, %v352, 0
        %440 = vmatprep.subr.mxu0 0.0
        %441 = vmatpush1.xpose.msra.mxu0 %v438
        %442 = vmatprep.subr.mxu0 0.0
        %443 = vmatpush1.xpose.msra.mxu0 0.0
        %444 = vmatprep.subr.mxu0 0.0
        %445 = vmatpush1.xpose.msra.mxu0 0.0
        %446 = vmatprep.subr.mxu0 0.0
        %447 = vmatpush1.xpose.msra.mxu0 0.0
        %448 = vmatprep.subr.mxu0 0.0
        %449 = vmatpush1.xpose.msra.mxu0 0.0
        %450 = vmatprep.subr.mxu0 0.0
        %451 = vmatpush1.xpose.msra.mxu0 0.0
        %452 = vmatprep.subr.mxu0 0.0
        %453 = vmatpush1.xpose.msra.mxu0 0.0
        %454 = vmatprep.subr.mxu0 0.0
        %455 = vmatpush1.xpose.msra.mxu0 0.0
        %456 = vmatprep.subr.mxu0 0.0
        %457 = vmatpush1.xpose.msra.mxu0 0.0
        %458 = vmatprep.subr.mxu0 0.0
        %459 = vmatpush1.xpose.msra.mxu0 0.0
        %460 = vmatprep.subr.mxu0 0.0
        %461 = vmatpush1.xpose.msra.mxu0 0.0
        %462 = vmatprep.subr.mxu0 0.0
        %463 = vmatpush1.xpose.msra.mxu0 0.0
        %464 = vmatprep.subr.mxu0 0.0
        %465 = vmatpush1.xpose.msra.mxu0 0.0
        %466 = vmatprep.subr.mxu0 0.0
        %467 = vmatpush1.xpose.msra.mxu0 0.0
        %468 = vmatprep.subr.mxu0 0.0
        %469 = vmatpush1.xpose.msra.mxu0 0.0
        %470 = vmatprep.subr.mxu0 0.0
        %471 = vmatpush1.xpose.msra.mxu0 0.0
        %472 = vmatprep.subr.mxu0 0.0
        %473 = vmatpush1.xpose.msra.mxu0 0.0
        %474 = vmatprep.subr.mxu0 0.0
        %475 = vmatpush1.xpose.msra.mxu0 0.0
        %476 = vmatprep.subr.mxu0 0.0
        %477 = vmatpush1.xpose.msra.mxu0 0.0
        %478 = vmatprep.subr.mxu0 0.0
        %479 = vmatpush1.xpose.msra.mxu0 0.0
        %480 = vmatprep.subr.mxu0 0.0
        %481 = vmatpush1.xpose.msra.mxu0 0.0
        %482 = vmatprep.subr.mxu0 0.0
        %483 = vmatpush1.xpose.msra.mxu0 0.0
        %484 = vmatprep.subr.mxu0 0.0
        %485 = vmatpush1.xpose.msra.mxu0 0.0
        %486 = vmatprep.subr.mxu0 0.0
        %487 = vmatpush1.xpose.msra.mxu0 0.0
        %488 = vmatprep.subr.mxu0 0.0
        %489 = vmatpush1.xpose.msra.mxu0 0.0
        %490 = vmatprep.subr.mxu0 0.0
        %491 = vmatpush1.xpose.msra.mxu0 0.0
        %492 = vmatprep.subr.mxu0 0.0
        %493 = vmatpush1.xpose.msra.mxu0 0.0
        %494 = vmatprep.subr.mxu0 0.0
        %495 = vmatpush1.xpose.msra.mxu0 0.0
        %496 = vmatprep.subr.mxu0 0.0
        %497 = vmatpush1.xpose.msra.mxu0 0.0
        %498 = vmatprep.subr.mxu0 0.0
        %499 = vmatpush1.xpose.msra.mxu0 0.0
        %500 = vmatprep.subr.mxu0 0.0
        %501 = vmatpush1.xpose.msra.mxu0 0.0
        %502 = vmatprep.subr.mxu0 0.0
        %503 = vmatpush1.xpose.msra.mxu0 0.0
        %504 = vmatprep.mubr.f32.mxu0 0.0
        %505 = vmatmul.mubr.f32.gmra.mrb[0].mxu0 %v435
        %v506 = vpop.f32.mrb[0].mxu0
        %v507 = vadd.f32 0.0, %v506
        %v508 = vpop.f32.mrb[0].mxu0
        %509 = vdwg.mxu0
        %v510 = vlaneseq
        %v511 = vshrl.u32 %v510, 7
        %v512 = vlaneseq
        %v513 = vand.u32 %v512, 127
        %vm514 = vcmp.le.s32.totalorder %v513, %v511
        %v515 = vsel %vm514, %v507, -inf
        %vm516 = vcmask 64512
        %v517 = vsel %vm516, %v515, -inf
        %518 = vmax.xlane.f32.xlu0 %v517
        %v519 = vpop.xlane.xlu0 %518
        %v520 = vsub.f32 %v515, %v519
        %v521 = vmul.f32 %v520, 1.442695
        %v522 = vpow.pop %v521
        %v523 = vsel %vm516, %v522, 0.0
        %524 = vadd.xlane.f32.xlu0 %v523
        %v525 = vpop.xlane.xlu0 %524
        %v526 = vrcp.pop %v525
        %v527 = vmul.f32 %v522, %v526
        %v529 = vsel %vm516, %v527, 0
        %531 = vmatprep.subr.mxu0 0.0
        %532 = vmatpush1.msra.mxu0 %v430
        %533 = vmatprep.subr.mxu0 0.0
        %534 = vmatpush1.msra.mxu0 0.0
        %535 = vmatprep.subr.mxu0 0.0
        %536 = vmatpush1.msra.mxu0 0.0
        %537 = vmatprep.subr.mxu0 0.0
        %538 = vmatpush1.msra.mxu0 0.0
        %539 = vmatprep.subr.mxu0 0.0
        %540 = vmatpush1.msra.mxu0 0.0
        %541 = vmatprep.subr.mxu0 0.0
        %542 = vmatpush1.msra.mxu0 0.0
        %543 = vmatprep.subr.mxu0 0.0
        %544 = vmatpush1.msra.mxu0 0.0
        %545 = vmatprep.subr.mxu0 0.0
        %546 = vmatpush1.msra.mxu0 0.0
        %547 = vmatprep.subr.mxu0 0.0
        %548 = vmatpush1.msra.mxu0 0.0
        %549 = vmatprep.subr.mxu0 0.0
        %550 = vmatpush1.msra.mxu0 0.0
        %551 = vmatprep.subr.mxu0 0.0
        %552 = vmatpush1.msra.mxu0 0.0
        %553 = vmatprep.subr.mxu0 0.0
        %554 = vmatpush1.msra.mxu0 0.0
        %555 = vmatprep.subr.mxu0 0.0
        %556 = vmatpush1.msra.mxu0 0.0
        %557 = vmatprep.subr.mxu0 0.0
        %558 = vmatpush1.msra.mxu0 0.0
        %559 = vmatprep.subr.mxu0 0.0
        %560 = vmatpush1.msra.mxu0 0.0
        %561 = vmatprep.subr.mxu0 0.0
        %562 = vmatpush1.msra.mxu0 0.0
        %563 = vmatprep.subr.mxu0 0.0
        %564 = vmatpush1.msra.mxu0 0.0
        %565 = vmatprep.subr.mxu0 0.0
        %566 = vmatpush1.msra.mxu0 0.0
        %567 = vmatprep.subr.mxu0 0.0
        %568 = vmatpush1.msra.mxu0 0.0
        %569 = vmatprep.subr.mxu0 0.0
        %570 = vmatpush1.msra.mxu0 0.0
        %571 = vmatprep.subr.mxu0 0.0
        %572 = vmatpush1.msra.mxu0 0.0
        %573 = vmatprep.subr.mxu0 0.0
        %574 = vmatpush1.msra.mxu0 0.0
        %575 = vmatprep.subr.mxu0 0.0
        %576 = vmatpush1.msra.mxu0 0.0
        %577 = vmatprep.subr.mxu0 0.0
        %578 = vmatpush1.msra.mxu0 0.0
        %579 = vmatprep.subr.mxu0 0.0
        %580 = vmatpush1.msra.mxu0 0.0
        %581 = vmatprep.subr.mxu0 0.0
        %582 = vmatpush1.msra.mxu0 0.0
        %583 = vmatprep.subr.mxu0 0.0
        %584 = vmatpush1.msra.mxu0 0.0
        %585 = vmatprep.subr.mxu0 0.0
        %586 = vmatpush1.msra.mxu0 0.0
        %587 = vmatprep.subr.mxu0 0.0
        %588 = vmatpush1.msra.mxu0 0.0
        %589 = vmatprep.subr.mxu0 0.0
        %590 = vmatpush1.msra.mxu0 0.0
        %591 = vmatprep.subr.mxu0 0.0
        %592 = vmatpush1.msra.mxu0 0.0
        %593 = vmatprep.subr.mxu0 0.0
        %594 = vmatpush1.msra.mxu0 0.0
        %595 = vmatprep.mubr.f32.mxu0 0.0
        %596 = vmatmul.mubr.f32.gmra.mrb[0].mxu0 %v529
        %v597 = vpop.f32.mrb[0].mxu0
        %v598 = vadd.f32 0.0, %v597
        %v599 = vpop.f32.mrb[0].mxu0
        %600 = vdwg.mxu0
        %601 = vst.msk [vmem:[%s188] sm:$0xff] %vm433, %v598
        %s602 = sand.u32 %s115, 1
        %s603 = scalar_lea.sflag [#allocation3], %s602
        %s604 = sand.u32 %s115, 1
        %s605 = smul.addr %s604, 8
        %s606 = scalar_lea.vmem [#allocation2], %s605
        // Predicated region
        $region37: #{tpu_custom_call.1} parent=35 // pred_check
          %p607 = pneg %p125
        $region38: #{tpu_custom_call.1} parent=35 // pred_check_branch
          %609 = sbr.rel (%p607) target = $region40
        $region39: #{tpu_custom_call.1} parent=35 // pred_region
          %s611 = ssub.s32 128, 128
          %612 = vsyncadd %s603, %s611
          %s613 = smul.addr %s18, 128
          %s614 = scalar_lea.hbm %s4, %s613
          %s616 = sshll.u32 %s606, 4
          %s617 = int_to_ptr.vmem [resolvable:$true] %s616
          %619 = dma.vmem_to_hbm [thread:$0]  %s617, 128, %s614, %s603
        $region40: #{tpu_custom_call.1} parent=35 // pred_fallthru
          _
      $region36: #{tpu_custom_call.1} parent=5 // pred_fallthru
        _
      %p620 = scmp.le.s32.totalorder 2, %s13
      // Predicated region
      $region41: #{tpu_custom_call.1} parent=5 // pred_check
        %p621 = pneg %p620
      $region42: #{tpu_custom_call.1} parent=5 // pred_check_branch
        %623 = sbr.rel (%p621) target = $region44
      $region43: #{tpu_custom_call.1} parent=5 // pred_region
        %s624 = ssub.s32 %s13, 2
        // Predicated region
        $region45: #{tpu_custom_call.1} parent=43 // pred_check
          %p625 = pneg %p131
        $region46: #{tpu_custom_call.1} parent=43 // pred_check_branch
          %627 = sbr.rel (%p625) target = $region48
        $region47: #{tpu_custom_call.1} parent=43 // pred_region
          %s628 = sand.u32 %s116, 1
          %s629 = scalar_lea.sflag [#allocation3], %s628
          %s630 = sand.u32 %s116, 1
          %s631 = smul.addr %s630, 8
          %s632 = scalar_lea.vmem [#allocation2], %s631
          %633 = dma.done %s629, 128
        $region48: #{tpu_custom_call.1} parent=43 // pred_fallthru
          _
      $region44: #{tpu_custom_call.1} parent=5 // pred_fallthru
        _
    $region6: #{tpu_custom_call.1} parent=1 // loop_footer
      %s17 = sadd.s32 1, %s13
    $region7: #{tpu_custom_call.1} parent=1 // loop_footer_branch
      %12 = sbr.rel target = $region3
    $region8: #{tpu_custom_call.1} parent=1 // loop_exit
      _
    %634 = vsyncpa [#allocation3], 1
    %s635 = scalar_lea.sflag [#allocation3], 1
    %636 = vsyncpa %s635, 1

</llo_original>
